<compile_context>
chip_gen: v5e
topology: v5e:2x2
jax: 0.10.0
libtpu: 0.0.40
codegen_flags: <defaults>
</compile_context>

<pallas_src>
import functools

import jax
import jax.numpy as jnp
from jax import lax
from jax.experimental import pallas as pl
from jax.experimental.pallas import tpu as pltpu


def _round_up(x, m):
    return ((x + m - 1) // m) * m


def _vmem_capacity_bytes():
    try:
        return int(pltpu.get_tpu_info().vmem_capacity_bytes)
    except Exception:
        return 64 << 20  # conservative (v7x per-TC) fallback


# ----------------------------- Pallas kernel -------------------------------
def _complex_gemm_kernel(xr_ref, xi_ref, wt_ref, wb_ref, b_ref, o_ref):
    # xr_ref/xi_ref: (tm, K)      im2col patches of the real / imag parts
    # wt_ref:        (K, 2*Cout)  [ Wr | Wi ]
    # wb_ref:        (K, 2*Cout)  [-Wi | Wr ]
    # b_ref:         (1, 2*Cout)  [ br - bi | br + bi ]
    # o_ref:         (tm, 2*Cout) [ Real | Imag ]
    acc = jnp.dot(xr_ref[...], wt_ref[...], preferred_element_type=jnp.float32)
    acc = acc + jnp.dot(xi_ref[...], wb_ref[...],
                        preferred_element_type=jnp.float32)
    o_ref[...] = (acc + b_ref[...]).astype(o_ref.dtype)


def _complex_gemm(xr, xi, w_top, w_bot, b_fused):
    """xr, xi: (M, K); w_top/w_bot: (K, 2*Cout); b_fused: (1, 2*Cout).

    Returns (M, 2*Cout) float32 = [Real | Imag].
    """
    M, K = xr.shape
    C2 = w_top.shape[1]
    in_size = jnp.dtype(xr.dtype).itemsize
    out_size = 4  # f32 output

    # ---- generation-aware VMEM budget / tile caps
    cap = _vmem_capacity_bytes()
    if cap <= (64 << 20):                      # v7x: 64 MiB per TC
        tm_max, tile_budget, limit_cap = 512, 24 << 20, 44 << 20
    else:                                      # v5e / v6e: 128 MiB
        tm_max = 2048 if K <= 256 else 1024
        tile_budget, limit_cap = 72 << 20, 96 << 20

    # >= 2 (target 4, even) grid steps: lets "parallel" shard across v7x's two
    # TensorCores and keeps the input/output DMA pipeline busy everywhere.
    target_steps = 4
    tm = min(tm_max, max(8, _round_up(pl.cdiv(M, target_steps), 8)))

    # Weight/bias are grid-invariant but their double-buffered copies still
    # occupy VMEM, so charge them to the budget.
    # TODO(synk): single-buffer them via pipeline_mode=pl.Buffered(1) once
    # Cin*kh*kw*Cout is large enough for the extra copy to matter.
    fixed = 2 * (2 * K * C2 * in_size) + 2 * C2 * 4

    def per_step_bytes(t):
        return (2 * 2 * t * K * in_size        # xr + xi tiles, double-buffered
                + 2 * t * C2 * out_size        # output tile, double-buffered
                + fixed)

    while tm > 8 and per_step_bytes(tm) > tile_budget:
        tm = max(8, _round_up(tm // 2, 8))

    grid = (pl.cdiv(M, tm),)
    vmem_limit = int(min(max(per_step_bytes(tm) + (8 << 20), 32 << 20),
                         limit_cap))

    cost = pl.CostEstimate(
        flops=4 * M * K * C2,                  # two (M,K)x(K,C2) matmuls
        transcendentals=0,
        bytes_accessed=(2 * M * K + 2 * K * C2) * in_size
                       + (M * C2 + C2) * 4)

    # TODO(synk): add a K grid axis (last, "arbitrary") with an f32 VMEM
    # accumulator + pl.when init/finalize once Cin*kh*kw grows large enough
    # that the full-K weight pressures v7x's 64 MiB VMEM.
    return pl.pallas_call(
        _complex_gemm_kernel,
        out_shape=jax.ShapeDtypeStruct((M, C2), jnp.float32),
        grid_spec=pltpu.PrefetchScalarGridSpec(
            num_scalar_prefetch=0,
            grid=grid,
            in_specs=[pl.BlockSpec((tm, K), lambda i: (i, 0)),
                      pl.BlockSpec((tm, K), lambda i: (i, 0)),
                      pl.BlockSpec((K, C2), lambda i: (0, 0)),
                      pl.BlockSpec((K, C2), lambda i: (0, 0)),
                      pl.BlockSpec((1, C2), lambda i: (0, 0))],
            out_specs=pl.BlockSpec((tm, C2), lambda i: (i, 0)),
        ),
        compiler_params=pltpu.CompilerParams(
            dimension_semantics=("parallel",),
            vmem_limit_bytes=vmem_limit),
        cost_estimate=cost,
    )(xr, xi, w_top, w_bot, b_fused)


# ------------------------------ JAX glue ------------------------------------
def _im2col_nhwc(x_nhwc, kh, kw, stride, padding, dilation):
    """x_nhwc: (N, H, W, C) -> (N*OH*OW, kh*kw*C), feature order (kh, kw, c).

    Builds the patch matrix directly in row-major (N, OH, OW) x (i, j, c)
    order: no transpose of the kh*kw-inflated tensor is ever needed.
    """
    # TODO(synk): fully fuse patch extraction into the kernel (kh*kw reduction
    # grid axis with windowed input index_maps) to drop the kh*kw x activation
    # read blow-up on mem-bound v5e.
    N, H, W, C = x_nhwc.shape
    if padding > 0:
        x_nhwc = jnp.pad(
            x_nhwc, ((0, 0), (padding, padding), (padding, padding), (0, 0)))
        H, W = H + 2 * padding, W + 2 * padding
    eff_kh = (kh - 1) * dilation + 1
    eff_kw = (kw - 1) * dilation + 1
    OH = (H - eff_kh) // stride + 1
    OW = (W - eff_kw) // stride + 1
    cols = []
    for i in range(kh):
        for j in range(kw):
            hi, wi = i * dilation, j * dilation
            cols.append(x_nhwc[:, hi:hi + (OH - 1) * stride + 1:stride,
                               wi:wi + (OW - 1) * stride + 1:stride, :])
    patches = jnp.concatenate(cols, axis=-1)          # (N, OH, OW, kh*kw*C)
    return patches.reshape(N * OH * OW, kh * kw * C), OH, OW


class ComplexConv2dPallas:
    """Complex Conv2d matching the PyTorch module (groups=1, dilation>=1).

    compute_dtype=jnp.bfloat16 is recommended on v6e/v7x (bf16 MXU peak, half
    the HBM read traffic); keep float32 when tight (1e-4) tolerances matter.
    """

    def __init__(self, in_channel, out_channel, kernel_size, stride=1,
                 padding=0, dilation=1, groups=1, bias=True, key=None,
                 compute_dtype=jnp.float32):
        if groups != 1:
            # TODO(synk): grouped complex conv (block-diagonal weight) not implemented.
            raise NotImplementedError("groups != 1 not supported")
        self.cin, self.cout = in_channel, out_channel
        self.kh = self.kw = kernel_size
        self.stride, self.padding, self.dilation = stride, padding, dilation
        self.use_bias = bias
        self.compute_dtype = compute_dtype

        key = jax.random.PRNGKey(42) if key is None else key
        k = 1.0 / (in_channel * kernel_size * kernel_size)
        bound = float(jnp.sqrt(k))
        ks = jax.random.split(key, 4)
        wshape = (out_channel, in_channel, kernel_size, kernel_size)
        self.w_real = jax.random.uniform(ks[0], wshape, jnp.float32, -bound, bound)
        self.w_imag = jax.random.uniform(ks[1], wshape, jnp.float32, -bound, bound)
        if bias:
            self.b_real = jax.random.uniform(ks[2], (out_channel,), jnp.float32, -bound, bound)
            self.b_imag = jax.random.uniform(ks[3], (out_channel,), jnp.float32, -bound, bound)
        else:
            self.b_real = jnp.zeros((out_channel,), jnp.float32)
            self.b_imag = jnp.zeros((out_channel,), jnp.float32)

        # ---- one-time kernel-operand prep ----------------------------------
        # Feature order (kh, kw, cin) to match the NHWC patch extraction.
        K = in_channel * kernel_size * kernel_size
        wr = self.w_real.transpose(2, 3, 1, 0).reshape(K, out_channel)
        wi = self.w_imag.transpose(2, 3, 1, 0).reshape(K, out_channel)
        # Xr @ [Wr|Wi] + Xi @ [-Wi|Wr] = [Xr@Wr - Xi@Wi | Xr@Wi + Xi@Wr]
        self.w_top = jnp.concatenate([wr, wi], axis=1).astype(compute_dtype)
        self.w_bot = jnp.concatenate([-wi, wr], axis=1).astype(compute_dtype)
        b_fused = jnp.concatenate([self.b_real - self.b_imag,
                                   self.b_real + self.b_imag])       # (2Cout,)
        self.b_fused = b_fused.reshape(1, 2 * out_channel).astype(jnp.float32)

        self._fwd = None  # lazily-built jitted forward

    def _build_fwd(self):
        kh, kw = self.kh, self.kw
        stride, padding, dilation = self.stride, self.padding, self.dilation
        cout, cdt = self.cout, self.compute_dtype

        def fwd(x, w_top, w_bot, b_fused):
            N = x.shape[0]
            # One relayout of the RAW input: (N,Cin,H,W,2) -> (2,N,H,W,Cin).
            xt = jnp.transpose(x, (4, 0, 2, 3, 1))
            pr, OH, OW = _im2col_nhwc(xt[0], kh, kw, stride, padding, dilation)
            pi, _, _ = _im2col_nhwc(xt[1], kh, kw, stride, padding, dilation)
            out = _complex_gemm(pr.astype(cdt), pi.astype(cdt),
                                w_top, w_bot, b_fused)     # (M, 2Cout) = [R|I]
            out = out.reshape(N, OH, OW, 2, cout)
            # TODO(synk): return (N, OH, OW, Cout, 2) directly where the
            # consumer allows it to skip this lane-width-2 permute.
            return out.transpose(0, 4, 1, 2, 3)            # (N,Cout,OH,OW,2)

        return jax.jit(fwd)

    def __call__(self, x):
        # x: (N, Cin, H, W, 2)
        if self._fwd is None:
            self._fwd = self._build_fwd()
        return self._fwd(x, self.w_top, self.w_bot, self.b_fused)


# ------------------------------ reference -----------------------------------
def _conv_ref(x, w, b, stride, padding, dilation):
    out = lax.conv_general_dilated(
        x, w, window_strides=(stride, stride),
        padding=[(padding, padding), (padding, padding)],
        rhs_dilation=(dilation, dilation),
        dimension_numbers=("NCHW", "OIHW", "NCHW"))
    return out + b[None, :, None, None]


def _reference(x, mod):
    x_r, x_i = x[..., 0], x[..., 1]
    cr = functools.partial(_conv_ref, w=mod.w_real, b=mod.b_real,
                           stride=mod.stride, padding=mod.padding,
                           dilation=mod.dilation)
    ci = functools.partial(_conv_ref, w=mod.w_imag, b=mod.b_imag,
                           stride=mod.stride, padding=mod.padding,
                           dilation=mod.dilation)
    real = cr(x_r) - ci(x_i)
    imag = ci(x_r) + cr(x_i)
    return jnp.stack((real, imag), axis=4)


# --------------------------------- main --------------------------------------
if __name__ == "__main__":
    key = jax.random.PRNGKey(0)
    N, Cin, H, W = 2, 4, 16, 16
    Cout, ksize = 8, 3

    x = jax.random.normal(key, (N, Cin, H, W, 2), dtype=jnp.float32)

    # float32 path (tight tolerance)
    mod = ComplexConv2dPallas(Cin, Cout, ksize, stride=1, padding=0,
                              dilation=1, bias=True,
                              key=jax.random.PRNGKey(1),
                              compute_dtype=jnp.float32)
    out = jax.block_until_ready(mod(x))
    ref = jax.block_until_ready(_reference(x, mod))
    assert out.shape == ref.shape, (out.shape, ref.shape)
    assert jnp.allclose(out, ref, atol=1e-4, rtol=1e-4), \
        float(jnp.max(jnp.abs(out - ref)))

    # bfloat16 operand path (recommended on v6e/v7x), looser tolerance
    mod_bf16 = ComplexConv2dPallas(Cin, Cout, ksize, stride=1, padding=1,
                                   dilation=1, bias=True,
                                   key=jax.random.PRNGKey(1),
                                   compute_dtype=jnp.bfloat16)
    out_b = jax.block_until_ready(mod_bf16(x))
    ref_b = jax.block_until_ready(_reference(x, mod_bf16))
    assert out_b.shape == ref_b.shape, (out_b.shape, ref_b.shape)
    assert jnp.allclose(out_b, ref_b, atol=1.2e-1, rtol=5e-2), \
        float(jnp.max(jnp.abs(out_b - ref_b)))

    print("KERNEL_OK")
</pallas_src>

<mosaic_0001>
module attributes {stable_mosaic.version = 11 : i64} {
  func.func @_complex_gemm_kernel(%arg0: i32, %arg1: memref<104x36xf32, #tpu.memory_space<vmem>>, %arg2: memref<104x36xf32, #tpu.memory_space<vmem>>, %arg3: memref<36x16xf32, #tpu.memory_space<vmem>>, %arg4: memref<36x16xf32, #tpu.memory_space<vmem>>, %arg5: memref<1x16xf32, #tpu.memory_space<vmem>>, %arg6: memref<104x16xf32, #tpu.memory_space<vmem>>) attributes {dimension_semantics = [#tpu.dimension_semantics<parallel>], iteration_bounds = array<i64: 4>, scalar_prefetch = 0 : i64, scratch_operands = 0 : i64, tpu.core_type = #tpu.core_type<tc>, window_params = [{transform_indices = @transform_0, window_bounds = array<i64: 104, 36>}, {transform_indices = @transform_1, window_bounds = array<i64: 104, 36>}, {pipeline_mode = #tpu.pipeline_mode<synchronous>, transform_indices = @transform_2, window_bounds = array<i64: 36, 16>}, {pipeline_mode = #tpu.pipeline_mode<synchronous>, transform_indices = @transform_3, window_bounds = array<i64: 36, 16>}, {pipeline_mode = #tpu.pipeline_mode<synchronous>, transform_indices = @transform_4, window_bounds = array<i64: 1, 16>}, {transform_indices = @transform_5, window_bounds = array<i64: 104, 16>}]} {
    %c0 = arith.constant 0 : index
    %c0_0 = arith.constant 0 : index
    %0 = vector.load %arg1[%c0, %c0_0] : memref<104x36xf32, #tpu.memory_space<vmem>>, vector<104x36xf32>
    %c0_1 = arith.constant 0 : index
    %c0_2 = arith.constant 0 : index
    %1 = vector.load %arg3[%c0_1, %c0_2] : memref<36x16xf32, #tpu.memory_space<vmem>>, vector<36x16xf32>
    %cst = arith.constant dense<0.000000e+00> : vector<104x16xf32>
    %2 = tpu.matmul %0, %1, %cst {dimension_numbers = #tpu.dot_dimension_numbers<[1], [0], [0], [1], [0, 0, 1, 1], [], []>} : vector<104x36xf32>, vector<36x16xf32>, vector<104x16xf32> -> vector<104x16xf32>
    %c0_3 = arith.constant 0 : index
    %c0_4 = arith.constant 0 : index
    %3 = vector.load %arg2[%c0_3, %c0_4] : memref<104x36xf32, #tpu.memory_space<vmem>>, vector<104x36xf32>
    %c0_5 = arith.constant 0 : index
    %c0_6 = arith.constant 0 : index
    %4 = vector.load %arg4[%c0_5, %c0_6] : memref<36x16xf32, #tpu.memory_space<vmem>>, vector<36x16xf32>
    %cst_7 = arith.constant dense<0.000000e+00> : vector<104x16xf32>
    %5 = tpu.matmul %3, %4, %cst_7 {dimension_numbers = #tpu.dot_dimension_numbers<[1], [0], [0], [1], [0, 0, 1, 1], [], []>} : vector<104x36xf32>, vector<36x16xf32>, vector<104x16xf32> -> vector<104x16xf32>
    %6 = arith.addf %2, %5 : vector<104x16xf32>
    %c0_8 = arith.constant 0 : index
    %c0_9 = arith.constant 0 : index
    %7 = vector.load %arg5[%c0_8, %c0_9] : memref<1x16xf32, #tpu.memory_space<vmem>>, vector<1x16xf32>
    %8 = vector.broadcast %7 : vector<1x16xf32> to vector<104x16xf32>
    %9 = arith.addf %6, %8 : vector<104x16xf32>
    %c0_10 = arith.constant 0 : index
    %c0_11 = arith.constant 0 : index
    %10 = vector.load %arg6[%c0_10, %c0_11] : memref<104x16xf32, #tpu.memory_space<vmem>>, vector<104x16xf32>
    tpu.vector_store %arg6[%c0_10, %c0_11], %9 {strides = array<i32>} : memref<104x16xf32, #tpu.memory_space<vmem>>, vector<104x16xf32>,
    return
  }
  func.func @transform_0(%arg0: i32) -> (i32, i32) {
    %c0_i32 = arith.constant 0 : i32
    %c0_i32_0 = arith.constant 0 : i32
    return %arg0, %c0_i32 : i32, i32
  }
  func.func @transform_1(%arg0: i32) -> (i32, i32) {
    %c0_i32 = arith.constant 0 : i32
    %c0_i32_0 = arith.constant 0 : i32
    return %arg0, %c0_i32 : i32, i32
  }
  func.func @transform_2(%arg0: i32) -> (i32, i32) {
    %c0_i32 = arith.constant 0 : i32
    %c0_i32_0 = arith.constant 0 : i32
    %c0_i32_1 = arith.constant 0 : i32
    return %c0_i32, %c0_i32_0 : i32, i32
  }
  func.func @transform_3(%arg0: i32) -> (i32, i32) {
    %c0_i32 = arith.constant 0 : i32
    %c0_i32_0 = arith.constant 0 : i32
    %c0_i32_1 = arith.constant 0 : i32
    return %c0_i32, %c0_i32_0 : i32, i32
  }
  func.func @transform_4(%arg0: i32) -> (i32, i32) {
    %c0_i32 = arith.constant 0 : i32
    %c0_i32_0 = arith.constant 0 : i32
    %c0_i32_1 = arith.constant 0 : i32
    return %c0_i32, %c0_i32_0 : i32, i32
  }
  func.func @transform_5(%arg0: i32) -> (i32, i32) {
    %c0_i32 = arith.constant 0 : i32
    %c0_i32_0 = arith.constant 0 : i32
    return %arg0, %c0_i32 : i32, i32
  }
}

</mosaic_0001>

<llo_original>
// kernel: fwd.1
$region0: #{fwd.1}
  #allocation0 [shape = 'u32[]', space=smem, size = 0x4, offset = 0x4, fixed_abs, tag = 'smem constant byte address 0x4 - core index']
  #allocation1 [shape = 'u32[72,128]{1,0:T(1,128)}', space=vmem, size = 0x9000, scoped, tag = 'internal scratch']
  %s0 = inlined_call_operand.vmem [shape: f32[392,36], index: 0, kind: input, shape index: {}]
  %s1 = inlined_call_operand.vmem [shape: f32[392,36], index: 1, kind: input, shape index: {}]
  %s2 = inlined_call_operand.vmem [shape: f32[36,16], index: 2, kind: input, shape index: {}]
  %s3 = inlined_call_operand.vmem [shape: f32[36,16], index: 3, kind: input, shape index: {}]
  %s4 = inlined_call_operand.vmem [shape: f32[1,16], index: 4, kind: input, shape index: {}]
  %s5 = inlined_call_operand.vmem [shape: f32[392,16], index: 5, kind: output, shape index: {}]
  %s6 = sld [smem:[#allocation0]]
  $region101: #{fwd.1} parent=0
    _
  %s8 = ssub.s32 1, %s6
  %s9 = scalar_select 0, %s8, %s6
  $region1: #{fwd.1} parent=0
    #allocation2 [shape = 'u8[106496]{0}', space=vmem, size = 0x1a000, scoped, tag = 'output window, operand 0']
    loop: start=0, step=1, limit=6
    $region2: #{fwd.1} parent=1 // loop_pre_header
      _
    $region3: #{fwd.1} parent=1 // loop_header
      %s11 = sphi 0, %s15
      %p12 = scmp.ge.s32.totalorder %s11, 6
      %s21 = sphi 0, %s23
      %s24 = sphi 0, %s21
      %s25 = sphi 0, %s24
      %s41 = sphi 0, %s25
      %s47 = sphi 0, %s49
      %s50 = sphi 0, %s47
      %s51 = sphi 0, %s50
      %s67 = sphi 0, %s51
      %s71 = sphi 0, %s71
      %s73 = sphi 0, %s71
      %s74 = sphi 0, %s73
      %s88 = sphi 0, %s74
      %s92 = sphi 0, %s92
      %s94 = sphi 0, %s92
      %s95 = sphi 0, %s94
      %s109 = sphi 0, %s95
      %s113 = sphi 0, %s113
      %s115 = sphi 0, %s113
      %s116 = sphi 0, %s115
      %s130 = sphi 0, %s116
      %s136 = sphi 0, %s138
      %s139 = sphi 0, %s136
      %s140 = sphi 0, %s139
      %s156 = sphi 0, %s140
    $region4: #{fwd.1} parent=1 // loop_header_branch
      %14 = sbr.rel (%p12) target = $region8
    $region5: #{fwd.1} parent=1 // loop_body
      %s16 = ssub.s32 %s11, 1
      %s17 = ssub.s32 %s11, 2
      %s18 = sadd.s32 %s11, 1
      %s19 = ssub.s32 %s11, %s18
      %p20 = scmp.eq.s32.totalorder %s19, 0
      %s22 = sadd.s32 %s21, 1
      %s23 = scalar_select %p20, %s21, %s22
      %p26 = pneg %p20
      %p27 = scmp.eq.s32.totalorder %s11, 3
      %p28 = por %p26, %p27
      %p29 = scmp.ne.s32.totalorder %s21, %s24
      %p30 = scmp.eq.s32.totalorder %s11, 0
      %p31 = por %p29, %p30
      %p32 = scmp.ne.s32.totalorder %s21, %s24
      %p33 = scmp.eq.s32.totalorder %s16, 3
      %p34 = por %p32, %p33
      %p35 = scmp.ne.s32.totalorder %s24, %s25
      %p36 = scmp.eq.s32.totalorder %s16, 0
      %p37 = por %p35, %p36
      %p38 = scmp.ne.s32.totalorder %s24, %s25
      %p39 = scmp.eq.s32.totalorder %s17, 3
      %p40 = por %p38, %p39
      %p42 = scmp.ne.s32.totalorder %s25, %s41
      %p43 = scmp.eq.s32.totalorder %s17, 0
      %p44 = por %p42, %p43
      %s45 = ssub.s32 %s11, %s18
      %p46 = scmp.eq.s32.totalorder %s45, 0
      %s48 = sadd.s32 %s47, 1
      %s49 = scalar_select %p46, %s47, %s48
      %p52 = pneg %p46
      %p53 = scmp.eq.s32.totalorder %s11, 3
      %p54 = por %p52, %p53
      %p55 = scmp.ne.s32.totalorder %s47, %s50
      %p56 = scmp.eq.s32.totalorder %s11, 0
      %p57 = por %p55, %p56
      %p58 = scmp.ne.s32.totalorder %s47, %s50
      %p59 = scmp.eq.s32.totalorder %s16, 3
      %p60 = por %p58, %p59
      %p61 = scmp.ne.s32.totalorder %s50, %s51
      %p62 = scmp.eq.s32.totalorder %s16, 0
      %p63 = por %p61, %p62
      %p64 = scmp.ne.s32.totalorder %s50, %s51
      %p65 = scmp.eq.s32.totalorder %s17, 3
      %p66 = por %p64, %p65
      %p68 = scmp.ne.s32.totalorder %s51, %s67
      %p69 = scmp.eq.s32.totalorder %s17, 0
      %p70 = por %p68, %p69
      %s72 = sadd.s32 %s71, 1
      %p75 = scmp.eq.s32.totalorder %s11, 3
      %p76 = scmp.ne.s32.totalorder %s71, %s73
      %p77 = scmp.eq.s32.totalorder %s11, 0
      %p78 = por %p76, %p77
      %p79 = scmp.ne.s32.totalorder %s71, %s73
      %p80 = scmp.eq.s32.totalorder %s16, 3
      %p81 = por %p79, %p80
      %p82 = scmp.ne.s32.totalorder %s73, %s74
      %p83 = scmp.eq.s32.totalorder %s16, 0
      %p84 = por %p82, %p83
      %p85 = scmp.ne.s32.totalorder %s73, %s74
      %p86 = scmp.eq.s32.totalorder %s17, 3
      %p87 = por %p85, %p86
      %p89 = scmp.ne.s32.totalorder %s74, %s88
      %p90 = scmp.eq.s32.totalorder %s17, 0
      %p91 = por %p89, %p90
      %s93 = sadd.s32 %s92, 1
      %p96 = scmp.eq.s32.totalorder %s11, 3
      %p97 = scmp.ne.s32.totalorder %s92, %s94
      %p98 = scmp.eq.s32.totalorder %s11, 0
      %p99 = por %p97, %p98
      %p100 = scmp.ne.s32.totalorder %s92, %s94
      %p101 = scmp.eq.s32.totalorder %s16, 3
      %p102 = por %p100, %p101
      %p103 = scmp.ne.s32.totalorder %s94, %s95
      %p104 = scmp.eq.s32.totalorder %s16, 0
      %p105 = por %p103, %p104
      %p106 = scmp.ne.s32.totalorder %s94, %s95
      %p107 = scmp.eq.s32.totalorder %s17, 3
      %p108 = por %p106, %p107
      %p110 = scmp.ne.s32.totalorder %s95, %s109
      %p111 = scmp.eq.s32.totalorder %s17, 0
      %p112 = por %p110, %p111
      %s114 = sadd.s32 %s113, 1
      %p117 = scmp.eq.s32.totalorder %s11, 3
      %p118 = scmp.ne.s32.totalorder %s113, %s115
      %p119 = scmp.eq.s32.totalorder %s11, 0
      %p120 = por %p118, %p119
      %p121 = scmp.ne.s32.totalorder %s113, %s115
      %p122 = scmp.eq.s32.totalorder %s16, 3
      %p123 = por %p121, %p122
      %p124 = scmp.ne.s32.totalorder %s115, %s116
      %p125 = scmp.eq.s32.totalorder %s16, 0
      %p126 = por %p124, %p125
      %p127 = scmp.ne.s32.totalorder %s115, %s116
      %p128 = scmp.eq.s32.totalorder %s17, 3
      %p129 = por %p127, %p128
      %p131 = scmp.ne.s32.totalorder %s116, %s130
      %p132 = scmp.eq.s32.totalorder %s17, 0
      %p133 = por %p131, %p132
      %s134 = ssub.s32 %s11, %s18
      %p135 = scmp.eq.s32.totalorder %s134, 0
      %s137 = sadd.s32 %s136, 1
      %s138 = scalar_select %p135, %s136, %s137
      %p141 = pneg %p135
      %p142 = scmp.eq.s32.totalorder %s11, 3
      %p143 = por %p141, %p142
      %p144 = scmp.ne.s32.totalorder %s136, %s139
      %p145 = scmp.eq.s32.totalorder %s11, 0
      %p146 = por %p144, %p145
      %p147 = scmp.ne.s32.totalorder %s136, %s139
      %p148 = scmp.eq.s32.totalorder %s16, 3
      %p149 = por %p147, %p148
      %p150 = scmp.ne.s32.totalorder %s139, %s140
      %p151 = scmp.eq.s32.totalorder %s16, 0
      %p152 = por %p150, %p151
      %p153 = scmp.ne.s32.totalorder %s139, %s140
      %p154 = scmp.eq.s32.totalorder %s17, 3
      %p155 = por %p153, %p154
      %p157 = scmp.ne.s32.totalorder %s140, %s156
      %p158 = scmp.eq.s32.totalorder %s17, 0
      %p159 = por %p157, %p158
      %p160 = scmp.le.s32.totalorder 1, %s11
      %p161 = scmp.lt.s32.totalorder %s11, 5
      %p162 = pnand %p160, %p161
      %p163 = pneg %p162
      // Predicated region
      $region9: #{fwd.1} parent=5 // pred_check
        _
      $region10: #{fwd.1} parent=5 // pred_check_branch
        %165 = sbr.rel (%p162) target = $region12
      $region11: #{fwd.1} parent=5 // pred_region
        %s166 = ssub.s32 %s11, 1
        // Predicated region
        $region13: #{fwd.1} parent=11 // pred_check
          %p167 = pneg %p84
        $region14: #{fwd.1} parent=11 // pred_check_branch
          %169 = sbr.rel (%p167) target = $region16
        $region15: #{fwd.1} parent=11 // pred_region
          _
        $region16: #{fwd.1} parent=11 // pred_fallthru
          _
        // Predicated region
        $region17: #{fwd.1} parent=11 // pred_check
          %p170 = pneg %p105
        $region18: #{fwd.1} parent=11 // pred_check_branch
          %172 = sbr.rel (%p170) target = $region20
        $region19: #{fwd.1} parent=11 // pred_region
          _
        $region20: #{fwd.1} parent=11 // pred_fallthru
          _
        // Predicated region
        $region21: #{fwd.1} parent=11 // pred_check
          %p173 = pneg %p126
        $region22: #{fwd.1} parent=11 // pred_check_branch
          %175 = sbr.rel (%p173) target = $region24
        $region23: #{fwd.1} parent=11 // pred_region
          _
        $region24: #{fwd.1} parent=11 // pred_fallthru
          _
      $region12: #{fwd.1} parent=5 // pred_fallthru
        _
      %p176 = scmp.lt.s32.totalorder %s11, 4
      // Predicated region
      $region25: #{fwd.1} parent=5 // pred_check
        %p177 = pneg %p176
      $region26: #{fwd.1} parent=5 // pred_check_branch
        %179 = sbr.rel (%p177) target = $region28
      $region27: #{fwd.1} parent=5 // pred_region
        // Predicated region
        $region29: #{fwd.1} parent=27 // pred_check
          %p180 = pneg %p31
        $region30: #{fwd.1} parent=27 // pred_check_branch
          %182 = sbr.rel (%p180) target = $region32
        $region31: #{fwd.1} parent=27 // pred_region
          %s183 = smul.u32 13, %s11
          %s184 = ssub.s32 49, %s183
          %p185 = scmp.lt.s32.totalorder %s184, 13
          %s186 = scalar_select %p185, %s184, 13
          %s187 = smul.u32 8, %s186
          %p188 = scmp.lt.s32.totalorder %s183, 48
          %s189 = scalar_select %p188, %s183, 48
          %s190 = smul.addr %s189, 8
          %s191 = scalar_lea.vmem %s0, %s190
          %s192 = smul.u32 13, %s11
          %s193 = ssub.s32 49, %s192
          %p194 = scmp.lt.s32.totalorder %s193, 13
          %s195 = scalar_select %p194, %s193, 13
          %s196 = smul.u32 8, %s195
        $region32: #{fwd.1} parent=27 // pred_fallthru
          _
        // Predicated region
        $region33: #{fwd.1} parent=27 // pred_check
          %p197 = pneg %p57
        $region34: #{fwd.1} parent=27 // pred_check_branch
          %199 = sbr.rel (%p197) target = $region36
        $region35: #{fwd.1} parent=27 // pred_region
          %s200 = smul.u32 13, %s11
          %s201 = ssub.s32 49, %s200
          %p202 = scmp.lt.s32.totalorder %s201, 13
          %s203 = scalar_select %p202, %s201, 13
          %s204 = smul.u32 8, %s203
          %p205 = scmp.lt.s32.totalorder %s200, 48
          %s206 = scalar_select %p205, %s200, 48
          %s207 = smul.addr %s206, 8
          %s208 = scalar_lea.vmem %s1, %s207
          %s209 = smul.u32 13, %s11
          %s210 = ssub.s32 49, %s209
          %p211 = scmp.lt.s32.totalorder %s210, 13
          %s212 = scalar_select %p211, %s210, 13
          %s213 = smul.u32 8, %s212
        $region36: #{fwd.1} parent=27 // pred_fallthru
          _
      $region28: #{fwd.1} parent=5 // pred_fallthru
        _
      %p214 = scmp.le.s32.totalorder 1, %s11
      %p215 = scmp.lt.s32.totalorder %s11, 5
      %p216 = pnand %p214, %p215
      %p217 = pneg %p216
      // Predicated region
      $region37: #{fwd.1} parent=5 // pred_check
        _
      $region38: #{fwd.1} parent=5 // pred_check_branch
        %219 = sbr.rel (%p216) target = $region40
      $region39: #{fwd.1} parent=5 // pred_region
        %s220 = ssub.s32 %s11, 1
        %s221 = smul.u32 13, %s16
        %s222 = ssub.s32 49, %s221
        %p223 = scmp.lt.s32.totalorder %s222, 13
        %s224 = scalar_select %p223, %s222, 13
        %s225 = smul.u32 8, %s224
        %p226 = scmp.lt.s32.totalorder %s221, 48
        %s227 = scalar_select %p226, %s221, 48
        %s228 = smul.addr %s227, 8
        %s229 = scalar_lea.vmem %s0, %s228
        %p230 = pneg %p37
        %p231 = pneg %p34
        %s232 = smul.u32 13, %s16
        %s233 = ssub.s32 49, %s232
        %p234 = scmp.lt.s32.totalorder %s233, 13
        %s235 = scalar_select %p234, %s233, 13
        %s236 = smul.u32 8, %s235
        %p237 = scmp.lt.s32.totalorder %s232, 48
        %s238 = scalar_select %p237, %s232, 48
        %s239 = smul.addr %s238, 8
        %s240 = scalar_lea.vmem %s1, %s239
        %p241 = pneg %p63
        %p242 = pneg %p60
        %p243 = pneg %p84
        %p244 = pneg %p81
        %p245 = pneg %p105
        %p246 = pneg %p102
        %p247 = pneg %p126
        %p248 = pneg %p123
        %p249 = pneg %p152
        %p250 = pneg %p149
        %s251 = sand.u32 %s139, 1
        %s252 = sand.u32 %s139, 1
        %s253 = smul.addr %s252, 104
        %s254 = scalar_lea.vmem [#allocation2], %s253
        %s255 = smul.u32 13, %s16
        %s256 = ssub.s32 49, %s255
        %p257 = scmp.lt.s32.totalorder %s256, 13
        %s258 = scalar_select %p257, %s256, 13
        %s259 = smul.u32 8, %s258
        %p260 = scmp.lt.s32.totalorder %s255, 48
        %s261 = scalar_select %p260, %s255, 48
        %s262 = smul.addr %s261, 8
        %s263 = scalar_lea.vmem %s0, %s262
        %s264 = smul.u32 13, %s16
        %s265 = ssub.s32 49, %s264
        %p266 = scmp.lt.s32.totalorder %s265, 13
        %s267 = scalar_select %p266, %s265, 13
        %s268 = smul.u32 8, %s267
        %s269 = smul.u32 13, %s16
        %s270 = ssub.s32 49, %s269
        %p271 = scmp.lt.s32.totalorder %s270, 13
        %s272 = scalar_select %p271, %s270, 13
        %s273 = smul.u32 8, %s272
        %p274 = scmp.lt.s32.totalorder %s269, 48
        %s275 = scalar_select %p274, %s269, 48
        %s276 = smul.addr %s275, 8
        %s277 = scalar_lea.vmem %s1, %s276
        %s278 = smul.u32 13, %s16
        %s279 = ssub.s32 49, %s278
        %p280 = scmp.lt.s32.totalorder %s279, 13
        %s281 = scalar_select %p280, %s279, 13
        %s282 = smul.u32 8, %s281
        %s283 = smul.u32 13, %s16
        %s284 = ssub.s32 49, %s283
        %p285 = scmp.lt.s32.totalorder %s284, 13
        %s286 = scalar_select %p285, %s284, 13
        %s287 = smul.u32 8, %s286
        %v288 = vld [vmem:[%s263] sm:$0xff]
        %v289 = vld [vmem:[%s263 + $0x8] sm:$0xff]
        %v290 = vld [vmem:[%s263 + $0x10] sm:$0xff]
        %v291 = vld [vmem:[%s263 + $0x18] sm:$0xff]
        %v292 = vld [vmem:[%s263 + $0x20] sm:$0xff]
        %v293 = vld [vmem:[%s263 + $0x28] sm:$0xff]
        %v294 = vld [vmem:[%s263 + $0x30] sm:$0xff]
        %v295 = vld [vmem:[%s263 + $0x38] sm:$0xff]
        %v296 = vld [vmem:[%s263 + $0x40] sm:$0xff]
        %v297 = vld [vmem:[%s263 + $0x48] sm:$0xff]
        %v298 = vld [vmem:[%s263 + $0x50] sm:$0xff]
        %v299 = vld [vmem:[%s263 + $0x58] sm:$0xff]
        %v300 = vld [vmem:[%s263 + $0x60] sm:$0xff]
        %v301 = vld [vmem:[%s2] sm:$0xff]
        %v302 = vld [vmem:[%s2 + $0x8] sm:$0xff]
        %v303 = vld [vmem:[%s2 + $0x10] sm:$0xff]
        %v304 = vld [vmem:[%s2 + $0x18] sm:$0xff]
        %v305 = vld [vmem:[%s2 + $0x20] sm:$0xf]
        %v306 = vld [vmem:[%s277] sm:$0xff]
        %v307 = vld [vmem:[%s277 + $0x8] sm:$0xff]
        %v308 = vld [vmem:[%s277 + $0x10] sm:$0xff]
        %v309 = vld [vmem:[%s277 + $0x18] sm:$0xff]
        %v310 = vld [vmem:[%s277 + $0x20] sm:$0xff]
        %v311 = vld [vmem:[%s277 + $0x28] sm:$0xff]
        %v312 = vld [vmem:[%s277 + $0x30] sm:$0xff]
        %v313 = vld [vmem:[%s277 + $0x38] sm:$0xff]
        %v314 = vld [vmem:[%s277 + $0x40] sm:$0xff]
        %v315 = vld [vmem:[%s277 + $0x48] sm:$0xff]
        %v316 = vld [vmem:[%s277 + $0x50] sm:$0xff]
        %v317 = vld [vmem:[%s277 + $0x58] sm:$0xff]
        %v318 = vld [vmem:[%s277 + $0x60] sm:$0xff]
        %v319 = vld [vmem:[%s3] sm:$0xff]
        %v320 = vld [vmem:[%s3 + $0x8] sm:$0xff]
        %v321 = vld [vmem:[%s3 + $0x10] sm:$0xff]
        %v322 = vld [vmem:[%s3 + $0x18] sm:$0xff]
        %v323 = vld [vmem:[%s3 + $0x20] sm:$0xf]
        %vm324 = vcmask 293888
        %v326 = vsel %vm324, %v306, 0
        %v329 = vsel %vm324, %v307, 0
        %v332 = vsel %vm324, %v308, 0
        %v335 = vsel %vm324, %v309, 0
        %v338 = vsel %vm324, %v310, 0
        %v341 = vsel %vm324, %v311, 0
        %v344 = vsel %vm324, %v312, 0
        %v347 = vsel %vm324, %v313, 0
        %v350 = vsel %vm324, %v314, 0
        %v353 = vsel %vm324, %v315, 0
        %v356 = vsel %vm324, %v316, 0
        %v359 = vsel %vm324, %v317, 0
        %v362 = vsel %vm324, %v318, 0
        %vm364 = vcmask 1043456
        %v366 = vsel %vm364, %v323, 0
        %368 = vmatpush.msra.mxu0 0.0
        %369 = vmatpush.msra.mxu0 0.0
        %370 = vmatpush.msra.mxu0 0.0
        %371 = vmatpush.msra.mxu0 0.0
        %372 = vmatpush.msra.mxu0 0.0
        %373 = vmatpush.msra.mxu0 0.0
        %374 = vmatpush.msra.mxu0 0.0
        %375 = vmatpush.msra.mxu0 0.0
        %376 = vmatpush.msra.mxu0 0.0
        %377 = vmatpush.msra.mxu0 0.0
        %378 = vmatpush.msra.mxu0 0.0
        %379 = vmatpush.msra.mxu0 %v366
        %380 = vmatpush.msra.mxu0 %v322
        %381 = vmatpush.msra.mxu0 %v321
        %382 = vmatpush.msra.mxu0 %v320
        %383 = vmatpush.msra.mxu0 %v319
        %384 = vmatmul.f32.gmra.mxu0 %v326
        %v385 = vpop.f32.mrf.mxu0
        %v386 = vadd.f32 0.0, %v385
        %387 = vmatmul.f32.gmra.mxu0 %v329
        %v388 = vpop.f32.mrf.mxu0
        %v389 = vadd.f32 0.0, %v388
        %390 = vmatmul.f32.gmra.mxu0 %v332
        %v391 = vpop.f32.mrf.mxu0
        %v392 = vadd.f32 0.0, %v391
        %393 = vmatmul.f32.gmra.mxu0 %v335
        %v394 = vpop.f32.mrf.mxu0
        %v395 = vadd.f32 0.0, %v394
        %396 = vmatmul.f32.gmra.mxu0 %v338
        %v397 = vpop.f32.mrf.mxu0
        %v398 = vadd.f32 0.0, %v397
        %399 = vmatmul.f32.gmra.mxu0 %v341
        %v400 = vpop.f32.mrf.mxu0
        %v401 = vadd.f32 0.0, %v400
        %402 = vmatmul.f32.gmra.mxu0 %v344
        %v403 = vpop.f32.mrf.mxu0
        %v404 = vadd.f32 0.0, %v403
        %405 = vmatmul.f32.gmra.mxu0 %v347
        %v406 = vpop.f32.mrf.mxu0
        %v407 = vadd.f32 0.0, %v406
        %408 = vmatmul.f32.gmra.mxu0 %v350
        %v409 = vpop.f32.mrf.mxu0
        %v410 = vadd.f32 0.0, %v409
        %411 = vmatmul.f32.gmra.mxu0 %v353
        %v412 = vpop.f32.mrf.mxu0
        %v413 = vadd.f32 0.0, %v412
        %414 = vmatmul.f32.gmra.mxu0 %v356
        %v415 = vpop.f32.mrf.mxu0
        %v416 = vadd.f32 0.0, %v415
        %417 = vmatmul.f32.gmra.mxu0 %v359
        %v418 = vpop.f32.mrf.mxu0
        %v419 = vadd.f32 0.0, %v418
        %420 = vmatmul.f32.gmra.mxu0 %v362
        %v421 = vpop.f32.mrf.mxu0
        %v422 = vadd.f32 0.0, %v421
        %423 = vdwg.mxu0
        %v425 = vsel %vm324, %v288, 0
        %v428 = vsel %vm324, %v289, 0
        %v431 = vsel %vm324, %v290, 0
        %v434 = vsel %vm324, %v291, 0
        %v437 = vsel %vm324, %v292, 0
        %v440 = vsel %vm324, %v293, 0
        %v443 = vsel %vm324, %v294, 0
        %v446 = vsel %vm324, %v295, 0
        %v449 = vsel %vm324, %v296, 0
        %v452 = vsel %vm324, %v297, 0
        %v455 = vsel %vm324, %v298, 0
        %v458 = vsel %vm324, %v299, 0
        %v461 = vsel %vm324, %v300, 0
        %v464 = vsel %vm364, %v305, 0
        %466 = vmatpush.msra.mxu0 0.0
        %467 = vmatpush.msra.mxu0 0.0
        %468 = vmatpush.msra.mxu0 0.0
        %469 = vmatpush.msra.mxu0 0.0
        %470 = vmatpush.msra.mxu0 0.0
        %471 = vmatpush.msra.mxu0 0.0
        %472 = vmatpush.msra.mxu0 0.0
        %473 = vmatpush.msra.mxu0 0.0
        %474 = vmatpush.msra.mxu0 0.0
        %475 = vmatpush.msra.mxu0 0.0
        %476 = vmatpush.msra.mxu0 0.0
        %477 = vmatpush.msra.mxu0 %v464
        %478 = vmatpush.msra.mxu0 %v304
        %479 = vmatpush.msra.mxu0 %v303
        %480 = vmatpush.msra.mxu0 %v302
        %481 = vmatpush.msra.mxu0 %v301
        %482 = vmatmul.f32.gmra.mxu0 %v425
        %v483 = vpop.f32.mrf.mxu0
        %v484 = vadd.f32 %v386, %v483
        %485 = vmatmul.f32.gmra.mxu0 %v428
        %v486 = vpop.f32.mrf.mxu0
        %v487 = vadd.f32 %v389, %v486
        %488 = vmatmul.f32.gmra.mxu0 %v431
        %v489 = vpop.f32.mrf.mxu0
        %v490 = vadd.f32 %v392, %v489
        %491 = vmatmul.f32.gmra.mxu0 %v434
        %v492 = vpop.f32.mrf.mxu0
        %v493 = vadd.f32 %v395, %v492
        %494 = vmatmul.f32.gmra.mxu0 %v437
        %v495 = vpop.f32.mrf.mxu0
        %v496 = vadd.f32 %v398, %v495
        %497 = vmatmul.f32.gmra.mxu0 %v440
        %v498 = vpop.f32.mrf.mxu0
        %v499 = vadd.f32 %v401, %v498
        %500 = vmatmul.f32.gmra.mxu0 %v443
        %v501 = vpop.f32.mrf.mxu0
        %v502 = vadd.f32 %v404, %v501
        %503 = vmatmul.f32.gmra.mxu0 %v446
        %v504 = vpop.f32.mrf.mxu0
        %v505 = vadd.f32 %v407, %v504
        %506 = vmatmul.f32.gmra.mxu0 %v449
        %v507 = vpop.f32.mrf.mxu0
        %v508 = vadd.f32 %v410, %v507
        %509 = vmatmul.f32.gmra.mxu0 %v452
        %v510 = vpop.f32.mrf.mxu0
        %v511 = vadd.f32 %v413, %v510
        %512 = vmatmul.f32.gmra.mxu0 %v455
        %v513 = vpop.f32.mrf.mxu0
        %v514 = vadd.f32 %v416, %v513
        %515 = vmatmul.f32.gmra.mxu0 %v458
        %v516 = vpop.f32.mrf.mxu0
        %v517 = vadd.f32 %v419, %v516
        %518 = vmatmul.f32.gmra.mxu0 %v461
        %v519 = vpop.f32.mrf.mxu0
        %v520 = vadd.f32 %v422, %v519
        %521 = vdwg.mxu0
        %v522 = vld [vmem:[%s4] sm:$0x1]
        %v524 = vperm.slane %v522, 0
        %v526 = vadd.f32 %v484, %v524
        %v527 = vadd.f32 %v487, %v524
        %v528 = vadd.f32 %v490, %v524
        %v529 = vadd.f32 %v493, %v524
        %v530 = vadd.f32 %v496, %v524
        %v531 = vadd.f32 %v499, %v524
        %v532 = vadd.f32 %v502, %v524
        %v533 = vadd.f32 %v505, %v524
        %v534 = vadd.f32 %v508, %v524
        %v535 = vadd.f32 %v511, %v524
        %v536 = vadd.f32 %v514, %v524
        %v537 = vadd.f32 %v517, %v524
        %v538 = vadd.f32 %v520, %v524
        %vm539 = vcmask 130048
        %540 = vst.msk [vmem:[%s254] sm:$0xff] %vm539, %v526
        %541 = vst.msk [vmem:[%s254 + $0x8] sm:$0xff] %vm539, %v527
        %542 = vst.msk [vmem:[%s254 + $0x10] sm:$0xff] %vm539, %v528
        %543 = vst.msk [vmem:[%s254 + $0x18] sm:$0xff] %vm539, %v529
        %544 = vst.msk [vmem:[%s254 + $0x20] sm:$0xff] %vm539, %v530
        %545 = vst.msk [vmem:[%s254 + $0x28] sm:$0xff] %vm539, %v531
        %546 = vst.msk [vmem:[%s254 + $0x30] sm:$0xff] %vm539, %v532
        %547 = vst.msk [vmem:[%s254 + $0x38] sm:$0xff] %vm539, %v533
        %548 = vst.msk [vmem:[%s254 + $0x40] sm:$0xff] %vm539, %v534
        %549 = vst.msk [vmem:[%s254 + $0x48] sm:$0xff] %vm539, %v535
        %550 = vst.msk [vmem:[%s254 + $0x50] sm:$0xff] %vm539, %v536
        %551 = vst.msk [vmem:[%s254 + $0x58] sm:$0xff] %vm539, %v537
        %552 = vst.msk [vmem:[%s254 + $0x60] sm:$0xff] %vm539, %v538
        %s553 = sand.u32 %s139, 1
        %s554 = sand.u32 %s139, 1
        %s555 = smul.addr %s554, 104
        %s556 = scalar_lea.vmem [#allocation2], %s555
        // Predicated region
        $region41: #{fwd.1} parent=39 // pred_check
          %p557 = pneg %p149
        $region42: #{fwd.1} parent=39 // pred_check_branch
          %559 = sbr.rel (%p557) target = $region44
        $region43: #{fwd.1} parent=39 // pred_region
          %s560 = smul.u32 13, %s16
          %s561 = ssub.s32 49, %s560
          %p562 = scmp.lt.s32.totalorder %s561, 13
          %s563 = scalar_select %p562, %s561, 13
          %s564 = smul.u32 8, %s563
          %p565 = scmp.ne.s32.totalorder 0, %s564
          %s566 = smul.addr %s560, 8
          %s567 = scalar_lea.vmem %s5, %s566
          // Predicated region
          $region45: #{fwd.1} parent=43 // pred_check
            %p568 = pneg %p565
          $region46: #{fwd.1} parent=43 // pred_check_branch
            %570 = sbr.rel (%p568) target = $region48
          $region47: #{fwd.1} parent=43 // pred_region
            // Predicated region
            $region49: #{fwd.1} parent=47 // pred_check
              _
            $region50: #{fwd.1} parent=47 // pred_check_branch
              %572 = sbr.rel (0) target = $region52
            $region51: #{fwd.1} parent=47 // pred_region
              // Predicated region
              $region71: #{fwd.1} parent=51 // pred_check
                _
              $region72: #{fwd.1} parent=51 // pred_check_branch
                %647 = sbr.rel (0) target = $region74
              $region73: #{fwd.1} parent=51 // pred_region
                %s648 = sdiv.u32.pop %s563, 13
                %s649 = srem.u32.pop %s563, 13
                // While loop
                $region75: #{fwd.1} parent=73 // loop_pre_header
                  _
                $region76: #{fwd.1} parent=73 // loop_header
                  %s651 = sphi 0, %s653
                  %p652 = scmp.ge.s32.totalorder %s651, %s648
                  %s656 = sphi 0, %s687
                  %s657 = sphi %s556, %s690
                  %s658 = sphi %s567, %s691
                $region77: #{fwd.1} parent=73 // loop_header_branch
                  %655 = sbr.rel (%p652) target = $region81
                $region78: #{fwd.1} parent=73 // loop_body
                  %v659 = vld [vmem:[%s657] sm:$0xff]
                  %660 = vst [vmem:[%s658] sm:$0xff] %v659
                  %v661 = vld [vmem:[%s657 + $0x8] sm:$0xff]
                  %662 = vst [vmem:[%s658 + $0x8] sm:$0xff] %v661
                  %v663 = vld [vmem:[%s657 + $0x10] sm:$0xff]
                  %664 = vst [vmem:[%s658 + $0x10] sm:$0xff] %v663
                  %v665 = vld [vmem:[%s657 + $0x18] sm:$0xff]
                  %666 = vst [vmem:[%s658 + $0x18] sm:$0xff] %v665
                  %v667 = vld [vmem:[%s657 + $0x20] sm:$0xff]
                  %668 = vst [vmem:[%s658 + $0x20] sm:$0xff] %v667
                  %v669 = vld [vmem:[%s657 + $0x28] sm:$0xff]
                  %670 = vst [vmem:[%s658 + $0x28] sm:$0xff] %v669
                  %v671 = vld [vmem:[%s657 + $0x30] sm:$0xff]
                  %672 = vst [vmem:[%s658 + $0x30] sm:$0xff] %v671
                  %v673 = vld [vmem:[%s657 + $0x38] sm:$0xff]
                  %674 = vst [vmem:[%s658 + $0x38] sm:$0xff] %v673
                  %v675 = vld [vmem:[%s657 + $0x40] sm:$0xff]
                  %676 = vst [vmem:[%s658 + $0x40] sm:$0xff] %v675
                  %v677 = vld [vmem:[%s657 + $0x48] sm:$0xff]
                  %678 = vst [vmem:[%s658 + $0x48] sm:$0xff] %v677
                  %v679 = vld [vmem:[%s657 + $0x50] sm:$0xff]
                  %680 = vst [vmem:[%s658 + $0x50] sm:$0xff] %v679
                  %v681 = vld [vmem:[%s657 + $0x58] sm:$0xff]
                  %682 = vst [vmem:[%s658 + $0x58] sm:$0xff] %v681
                  %v683 = vld [vmem:[%s657 + $0x60] sm:$0xff]
                  %684 = vst [vmem:[%s658 + $0x60] sm:$0xff] %v683
                  %s685 = sadd.s32 1, %s656
                  %p686 = scmp.ge.s32.totalorder %s685, %s648
                  %s687 = scalar_select %p686, 0, %s685
                  %s688 = smul.u32 %s687, 104
                  %s689 = smul.u32 %s687, 104
                  %s690 = scalar_lea.vmem %s556, %s688 [#allocation2]
                  %s691 = scalar_lea.vmem %s567, %s689
                $region79: #{fwd.1} parent=73 // loop_footer
                  %s653 = sadd.s32 %s651, 1
                $region80: #{fwd.1} parent=73 // loop_footer_branch
                  %650 = sbr.rel target = $region76
                $region81: #{fwd.1} parent=73 // loop_exit
                  _
                %s692 = sdiv.u32.pop %s563, 13
                %s693 = srem.u32.pop %s563, 13
                %s694 = smul.u32 %s692, 13
                %s695 = smul.u32 8, %s694
                %s696 = scalar_lea.vmem %s556, %s695 [#allocation2]
                %s697 = smul.u32 8, %s694
                %s698 = scalar_lea.vmem %s567, %s697
                // While loop
                $region82: #{fwd.1} parent=73 // loop_pre_header
                  _
                $region83: #{fwd.1} parent=73 // loop_header
                  %s700 = sphi 0, %s702
                  %p701 = scmp.ge.s32.totalorder %s700, %s693
                  %s705 = sphi 0, %s712
                  %s706 = sphi %s696, %s715
                  %s707 = sphi %s698, %s716
                $region84: #{fwd.1} parent=73 // loop_header_branch
                  %704 = sbr.rel (%p701) target = $region88
                $region85: #{fwd.1} parent=73 // loop_body
                  %v708 = vld [vmem:[%s706] sm:$0xff]
                  %709 = vst [vmem:[%s707] sm:$0xff] %v708
                  %s710 = sadd.s32 1, %s705
                  %p711 = scmp.ge.s32.totalorder %s710, %s693
                  %s712 = scalar_select %p711, 0, %s710
                  %s713 = smul.u32 %s712, 8
                  %s714 = smul.u32 %s712, 8
                  %s715 = scalar_lea.vmem %s696, %s713 [#allocation2]
                  %s716 = scalar_lea.vmem %s698, %s714
                $region86: #{fwd.1} parent=73 // loop_footer
                  %s702 = sadd.s32 %s700, 1
                $region87: #{fwd.1} parent=73 // loop_footer_branch
                  %699 = sbr.rel target = $region83
                $region88: #{fwd.1} parent=73 // loop_exit
                  _
              $region74: #{fwd.1} parent=51 // pred_fallthru
                _
              // Predicated region
              $region89: #{fwd.1} parent=51 // pred_check
                _
              $region90: #{fwd.1} parent=51 // pred_check_branch
                %718 = sbr.rel target = $region92
              $region91: #{fwd.1} parent=51 // pred_region
                _
              $region92: #{fwd.1} parent=51 // pred_fallthru
                _
            $region52: #{fwd.1} parent=47 // pred_fallthru
              _
            // Predicated region
            $region53: #{fwd.1} parent=47 // pred_check
              _
            $region54: #{fwd.1} parent=47 // pred_check_branch
              %574 = sbr.rel target = $region56
            $region55: #{fwd.1} parent=47 // pred_region
              %s576 = ssub.s32 256, 1
              %s577 = sdiv.u32.pop %s563, 13
              %s578 = srem.u32.pop %s563, 13
              // While loop
              $region57: #{fwd.1} parent=55 // loop_pre_header
                _
              $region58: #{fwd.1} parent=55 // loop_header
                %s580 = sphi 0, %s582
                %p581 = scmp.ge.s32.totalorder %s580, %s577
                %s585 = sphi 0, %s616
                %s586 = sphi %s556, %s619
                %s587 = sphi %s567, %s620
              $region59: #{fwd.1} parent=55 // loop_header_branch
                %584 = sbr.rel (%p581) target = $region63
              $region60: #{fwd.1} parent=55 // loop_body
                %v588 = vld [vmem:[%s586] sm:%s576]
                %589 = vst [vmem:[%s587] sm:%s576] %v588
                %v590 = vld [vmem:[%s586 + $0x8] sm:%s576]
                %591 = vst [vmem:[%s587 + $0x8] sm:%s576] %v590
                %v592 = vld [vmem:[%s586 + $0x10] sm:%s576]
                %593 = vst [vmem:[%s587 + $0x10] sm:%s576] %v592
                %v594 = vld [vmem:[%s586 + $0x18] sm:%s576]
                %595 = vst [vmem:[%s587 + $0x18] sm:%s576] %v594
                %v596 = vld [vmem:[%s586 + $0x20] sm:%s576]
                %597 = vst [vmem:[%s587 + $0x20] sm:%s576] %v596
                %v598 = vld [vmem:[%s586 + $0x28] sm:%s576]
                %599 = vst [vmem:[%s587 + $0x28] sm:%s576] %v598
                %v600 = vld [vmem:[%s586 + $0x30] sm:%s576]
                %601 = vst [vmem:[%s587 + $0x30] sm:%s576] %v600
                %v602 = vld [vmem:[%s586 + $0x38] sm:%s576]
                %603 = vst [vmem:[%s587 + $0x38] sm:%s576] %v602
                %v604 = vld [vmem:[%s586 + $0x40] sm:%s576]
                %605 = vst [vmem:[%s587 + $0x40] sm:%s576] %v604
                %v606 = vld [vmem:[%s586 + $0x48] sm:%s576]
                %607 = vst [vmem:[%s587 + $0x48] sm:%s576] %v606
                %v608 = vld [vmem:[%s586 + $0x50] sm:%s576]
                %609 = vst [vmem:[%s587 + $0x50] sm:%s576] %v608
                %v610 = vld [vmem:[%s586 + $0x58] sm:%s576]
                %611 = vst [vmem:[%s587 + $0x58] sm:%s576] %v610
                %v612 = vld [vmem:[%s586 + $0x60] sm:%s576]
                %613 = vst [vmem:[%s587 + $0x60] sm:%s576] %v612
                %s614 = sadd.s32 1, %s585
                %p615 = scmp.ge.s32.totalorder %s614, %s577
                %s616 = scalar_select %p615, 0, %s614
                %s617 = smul.u32 %s616, 104
                %s618 = smul.u32 %s616, 104
                %s619 = scalar_lea.vmem %s556, %s617 [#allocation2]
                %s620 = scalar_lea.vmem %s567, %s618
              $region61: #{fwd.1} parent=55 // loop_footer
                %s582 = sadd.s32 %s580, 1
              $region62: #{fwd.1} parent=55 // loop_footer_branch
                %579 = sbr.rel target = $region58
              $region63: #{fwd.1} parent=55 // loop_exit
                _
              %s621 = sdiv.u32.pop %s563, 13
              %s622 = srem.u32.pop %s563, 13
              %s623 = smul.u32 %s621, 13
              %s624 = smul.u32 8, %s623
              %s625 = scalar_lea.vmem %s556, %s624 [#allocation2]
              %s626 = smul.u32 8, %s623
              %s627 = scalar_lea.vmem %s567, %s626
              // While loop
              $region64: #{fwd.1} parent=55 // loop_pre_header
                _
              $region65: #{fwd.1} parent=55 // loop_header
                %s629 = sphi 0, %s631
                %p630 = scmp.ge.s32.totalorder %s629, %s622
                %s634 = sphi 0, %s641
                %s635 = sphi %s625, %s644
                %s636 = sphi %s627, %s645
              $region66: #{fwd.1} parent=55 // loop_header_branch
                %633 = sbr.rel (%p630) target = $region70
              $region67: #{fwd.1} parent=55 // loop_body
                %v637 = vld [vmem:[%s635] sm:%s576]
                %638 = vst [vmem:[%s636] sm:%s576] %v637
                %s639 = sadd.s32 1, %s634
                %p640 = scmp.ge.s32.totalorder %s639, %s622
                %s641 = scalar_select %p640, 0, %s639
                %s642 = smul.u32 %s641, 8
                %s643 = smul.u32 %s641, 8
                %s644 = scalar_lea.vmem %s625, %s642 [#allocation2]
                %s645 = scalar_lea.vmem %s627, %s643
              $region68: #{fwd.1} parent=55 // loop_footer
                %s631 = sadd.s32 %s629, 1
              $region69: #{fwd.1} parent=55 // loop_footer_branch
                %628 = sbr.rel target = $region65
              $region70: #{fwd.1} parent=55 // loop_exit
                _
            $region56: #{fwd.1} parent=47 // pred_fallthru
              _
          $region48: #{fwd.1} parent=43 // pred_fallthru
            _
          %719 = vnop
        $region44: #{fwd.1} parent=39 // pred_fallthru
          _
      $region40: #{fwd.1} parent=5 // pred_fallthru
        _
      %p720 = scmp.le.s32.totalorder 2, %s11
      // Predicated region
      $region93: #{fwd.1} parent=5 // pred_check
        %p721 = pneg %p720
      $region94: #{fwd.1} parent=5 // pred_check_branch
        %723 = sbr.rel (%p721) target = $region96
      $region95: #{fwd.1} parent=5 // pred_region
        %s724 = ssub.s32 %s11, 2
        // Predicated region
        $region97: #{fwd.1} parent=95 // pred_check
          %p725 = pneg %p155
        $region98: #{fwd.1} parent=95 // pred_check_branch
          %727 = sbr.rel (%p725) target = $region100
        $region99: #{fwd.1} parent=95 // pred_region
          %s728 = sand.u32 %s140, 1
          %s729 = sand.u32 %s140, 1
          %s730 = smul.addr %s729, 104
          %s731 = scalar_lea.vmem [#allocation2], %s730
        $region100: #{fwd.1} parent=95 // pred_fallthru
          _
      $region96: #{fwd.1} parent=5 // pred_fallthru
        _
    $region6: #{fwd.1} parent=1 // loop_footer
      %s15 = sadd.s32 1, %s11
    $region7: #{fwd.1} parent=1 // loop_footer_branch
      %10 = sbr.rel target = $region3
    $region8: #{fwd.1} parent=1 // loop_exit
      _

</llo_original>
